<compile_context>
chip_gen: v6e
topology: v6e:2x2x1
jax: 0.10.0
libtpu: 0.0.40
codegen_flags: <defaults>
</compile_context>

<pallas_src>
import collections
import functools
import math

import jax
import jax.numpy as jnp
from jax import lax
from jax.experimental import pallas as pl
from jax.experimental.pallas import tpu as pltpu


def _round_up(x, m):
    return ((x + m - 1) // m) * m


# ----------------------------------------------------------------------------
# Per-generation hardware provisioning
# ----------------------------------------------------------------------------
_HwInfo = collections.namedtuple(
    "_HwInfo",
    ["vmem_capacity", "default_scoped_vmem", "num_tensorcores",
     "bf16_vpu", "default_tile_rows"],
)


def _tpu_hw_info():
    kind = ""
    try:
        kind = jax.devices()[0].device_kind.lower()
    except Exception:  # pragma: no cover - defensive
        pass

    if ("v5e" in kind) or ("v5 lite" in kind) or ("v5lite" in kind):
        info = _HwInfo(128 << 20, 16 << 20, 1, False, 1024)
    elif "v6" in kind:
        info = _HwInfo(128 << 20, 32 << 20, 1, True, 1024)
    elif ("v7" in kind) or ("7x" in kind):
        info = _HwInfo(64 << 20, 32 << 20, 2, True, 512)
    else:
        # Unknown generation: conservative defaults.
        info = _HwInfo(64 << 20, 16 << 20, 1, False, 512)

    # Prefer the real physical VMEM capacity when the runtime exposes it.
    try:
        cap = int(pltpu.get_tpu_info().vmem_capacity_bytes)
        if cap > 0:
            info = info._replace(vmem_capacity=cap)
    except Exception:  # pragma: no cover - defensive
        pass
    return info


def _padded_bytes(shape, dtype):
    """VMEM footprint of a small resident array incl. (sublane, 128) padding."""
    s = jnp.dtype(dtype).itemsize
    if len(shape) == 0:
        r, c = 1, 1
    elif len(shape) == 1:
        r, c = 1, shape[0]
    else:
        r, c = int(math.prod(shape[:-1])), shape[-1]
    sublane = {4: 8, 2: 16, 1: 32}.get(s, 8)
    return _round_up(r, sublane) * _round_up(c, 128) * s


def _const_param_spec(shape, single_buffer):
    idx_map = lambda i: (0,) * len(shape)
    if single_buffer:
        try:
            # Constant index_map -> fetched once; double-buffering would only
            # double the resident parameter VMEM for zero DMA benefit.
            return pl.BlockSpec(shape, idx_map, pipeline_mode=pl.Buffered(1))
        except TypeError:
            pass
    return pl.BlockSpec(shape, idx_map)


# ----------------------------------------------------------------------------
# Kernel
# ----------------------------------------------------------------------------
def _mlp_kernel(num_layers, last_layer_on_vpu, compute_dtype, *refs):
    # refs = [x_ref, w0, b0, w1, b1, ..., w_{L-1}, b_{L-1}, out_ref]
    #   x_ref : (tile_rows, feat)     row-major input tile
    #   w_i   : (out_i, in_i)         PyTorch Linear layout (matmul dtype)
    #           (last layer, VPU path: f32 column (hidden, 1))
    #   b_i   : (out_i, 1)            compute dtype (last layer: f32)
    #   out   : (num_out, tile_rows)  feature-major, lane-dense result tile
    x_ref = refs[0]
    out_ref = refs[-1]
    params = refs[1:-1]

    h = None
    for layer in range(num_layers):
        w_ref = params[2 * layer]
        b_ref = params[2 * layer + 1]
        is_last = layer == num_layers - 1

        if layer == 0:
            w0 = w_ref[...]
            x = x_ref[...]
            if x.dtype != w0.dtype:
                x = x.astype(w0.dtype)
            # Contract the lane (feature) axis of both operands (Q.K^T form);
            # lowers as a transposed-RHS MXU matmul.
            # TODO(synk): re-verify via pl.lower_as_mlir that no vxpose of the
            # (tile_rows, feat) tile is materialized for very wide feat.
            h = lax.dot_general(
                w0, x,
                dimension_numbers=(((1,), (1,)), ((), ())),
                preferred_element_type=jnp.float32,
            )  # (H0, tile_rows) f32
        elif is_last and last_layer_on_vpu:
            # Small-hidden (hidden -> 1) projection off the MXU: f32 weight
            # column broadcast-multiply over lanes + XLU sublane reduce.
            h = jnp.sum(w_ref[...] * h.astype(jnp.float32), axis=0,
                        keepdims=True)  # (1, tile_rows) f32
        else:
            w = w_ref[...]
            if h.dtype != w.dtype:
                h = h.astype(w.dtype)
            h = jnp.dot(w, h, preferred_element_type=jnp.float32)

        if is_last:
            h = h.astype(jnp.float32) + b_ref[...]        # f32 before sigmoid
        else:
            # bias-add + ReLU in the chip's native VPU dtype (bf16 on v6e/v7x,
            # f32 on v5e); h then feeds the next matmul without another cast.
            h = jnp.maximum(h.astype(compute_dtype) + b_ref[...], 0)
            # TODO(synk): training-mode Dropout omitted (eval/inference mode).

    # Sigmoid: EUP exp + exact EUP reciprocal (tight parity with torch.sigmoid).
    out = pl.reciprocal(1.0 + jnp.exp(-h), approx=False)
    out_ref[...] = out.astype(out_ref.dtype)


# ----------------------------------------------------------------------------
# Wrapper
# ----------------------------------------------------------------------------
def mlp_clip_encoder_forward(x, weights, biases, num_in_features, *,
                             tile_rows=None, matmul_dtype=jnp.bfloat16):
    """Fused MLPClipEncoder forward.

    x       : (B, S, F) or (B, S*F)
    weights : list of (out_i, in_i) arrays  (PyTorch nn.Linear layout)
    biases  : list of (out_i,) arrays
    returns : (B, S, num_out_features) with sigmoid applied.
    """
    num_layers = len(weights)
    assert num_layers >= 1 and len(biases) == num_layers

    batch = x.shape[0]
    if x.ndim == 2:
        x = x.reshape(batch, -1, num_in_features)
    seq, feat = x.shape[1], x.shape[2]
    assert feat == num_in_features

    rows = batch * seq
    num_out = weights[-1].shape[0]
    x2d = x.reshape(rows, feat)
    # NOTE: if the producer can emit bf16 activations, pass x already in bf16
    # (fused upstream) to halve the HBM-bound input read; do NOT add a
    # standalone f32->bf16 pass here (extra HBM round trip).

    hw = _tpu_hw_info()
    if tile_rows is None:
        tile_rows = hw.default_tile_rows

    # bf16 epilogue only where the VPU has a native bf16 path (v6e/v7x).
    compute_dtype = (
        jnp.bfloat16
        if (hw.bf16_vpu and jnp.dtype(matmul_dtype) == jnp.dtype(jnp.bfloat16))
        else jnp.float32
    )

    # Last-layer VPU+XLU projection only pays off for small hidden widths.
    last_on_vpu = (num_out == 1 and num_layers > 1
                   and weights[-1].shape[1] <= 512)

    # ---- parameter staging (all fully VMEM-resident) ----
    flat_params = []
    for li, (w, b) in enumerate(zip(weights, biases)):
        is_last = li == num_layers - 1
        if is_last and last_on_vpu:
            w_c = jnp.asarray(w, jnp.float32).reshape(-1, 1)   # (hidden, 1)
        else:
            w_c = jnp.asarray(w, matmul_dtype)                 # (out_i, in_i)
        b_dtype = jnp.float32 if is_last else compute_dtype
        b_c = jnp.asarray(b, b_dtype).reshape(-1, 1)           # (out_i, 1)
        flat_params += [w_c, b_c]

    widths = [feat] + [int(w.shape[0]) for w in weights]
    max_w = max(widths)
    param_bytes = sum(_padded_bytes(p.shape, p.dtype) for p in flat_params)
    itm_io = jnp.dtype(x2d.dtype).itemsize

    def vmem_needed(tr, param_factor):
        in_tile = _round_up(tr, 8) * _round_up(feat, 128) * itm_io
        out_tile = _round_up(num_out, 8) * _round_up(tr, 128) * itm_io
        # Two live f32 activation buffers at the widest layer.
        act = 2 * tr * _round_up(max_w, 128) * 4
        return (2 * in_tile + 2 * out_tile
                + param_factor * param_bytes + act + (1 << 20))

    # ---- pick the row tile (lane-dense multiple of 128) ----
    if rows <= tile_rows:
        if hw.num_tensorcores >= 2 and rows > 256:
            # Keep >= 2 parallel grid steps so both v7x TensorCores get work.
            tr = max(_round_up((rows + 1) // 2, 128), 128)
        else:
            tr = max(_round_up(rows, 128), 128)
    else:
        tr = _round_up(tile_rows, 128)

    usable_vmem = hw.vmem_capacity - (8 << 20)   # leave compiler headroom
    while tr > 128 and vmem_needed(tr, 1) > usable_vmem:
        tr = max(_round_up(tr // 2, 128), 128)

    rows_pad = _round_up(rows, tr)
    if rows_pad != rows:
        x2d = jnp.pad(x2d, ((0, rows_pad - rows), (0, 0)))
    grid = (rows_pad // tr,)

    out_shape = jax.ShapeDtypeStruct((num_out, rows_pad), x.dtype)
    kernel = functools.partial(_mlp_kernel, num_layers, last_on_vpu,
                               compute_dtype)

    def run(single_buffer_params):
        in_specs = [pl.BlockSpec((tr, feat), lambda i: (i, 0))]
        for p in flat_params:
            in_specs.append(_const_param_spec(p.shape, single_buffer_params))
        # Feature-major output: rows on lanes -> unmasked lane-dense stores.
        out_specs = pl.BlockSpec((num_out, tr), lambda i: (0, i))

        needed = vmem_needed(tr, 1 if single_buffer_params else 2)
        cp_kwargs = dict(dimension_semantics=("parallel",))
        if needed > hw.default_scoped_vmem:
            cp_kwargs["vmem_limit_bytes"] = int(
                min(needed + (4 << 20), usable_vmem))
        return pl.pallas_call(
            kernel,
            out_shape=out_shape,
            grid_spec=pltpu.PrefetchScalarGridSpec(
                num_scalar_prefetch=0,
                grid=grid,
                in_specs=in_specs,
                out_specs=out_specs,
            ),
            compiler_params=pltpu.CompilerParams(**cp_kwargs),
        )(x2d, *flat_params)

    try:
        y_t = run(True)
    except Exception:
        # Fallback if this JAX build rejects single-buffered (Buffered(1))
        # parameter BlockSpecs.
        y_t = run(False)

    y2d = y_t[:, :rows].T                     # back to row-major (rows, num_out)
    return y2d.reshape(batch, seq, num_out)


# ----------------------------------------------------------------------------
# Deterministic parameter init (PyTorch Linear layout: weight (out,in), bias (out))
# ----------------------------------------------------------------------------
def init_params(key, num_in_features, hidden_size, num_layers, num_out_features):
    weights, biases = [], []
    in_f = num_in_features
    for i in range(num_layers):
        out_f = hidden_size if i < num_layers - 1 else num_out_features
        key, k_w, k_b = jax.random.split(key, 3)
        bound = 1.0 / math.sqrt(in_f)
        w = jax.random.uniform(k_w, (out_f, in_f), jnp.float32, -bound, bound)
        b = jax.random.uniform(k_b, (out_f,), jnp.float32, -bound, bound)
        weights.append(w)
        biases.append(b)
        in_f = out_f
    return weights, biases


# ----------------------------------------------------------------------------
# Reference (plain JAX) for sanity check
# ----------------------------------------------------------------------------
def ref_forward(x, weights, biases, num_in_features):
    batch = x.shape[0]
    if x.ndim == 2:
        x = x.reshape(batch, -1, num_in_features)
    h = x.astype(jnp.float32)
    L = len(weights)
    for i, (w, b) in enumerate(zip(weights, biases)):
        h = h @ w.T + b
        if i < L - 1:
            h = jnp.maximum(h, 0.0)
    return jax.nn.sigmoid(h)


if __name__ == "__main__":
    # Small shapes consistent with the module's forward.
    batch, seq = 2, 8
    num_in_features = 32
    hidden_size = 32
    num_layers = 3
    num_out_features = 1

    key = jax.random.PRNGKey(0)
    key, k_x = jax.random.split(key)
    x = jax.random.normal(k_x, (batch, seq, num_in_features), jnp.float32)

    weights, biases = init_params(
        key, num_in_features, hidden_size, num_layers, num_out_features
    )

    y_ref = ref_forward(x, weights, biases, num_in_features)

    # Default path: bf16 MXU operands (+ bf16 epilogue on v6e/v7x).
    y = mlp_clip_encoder_forward(x, weights, biases, num_in_features)
    y = jax.block_until_ready(y)
    assert y.shape == (batch, seq, num_out_features), y.shape
    err = float(jnp.max(jnp.abs(y - y_ref)))
    assert err < 3e-2, err

    # Strict-accuracy path: full-f32 matmuls + f32 epilogue.
    y32 = mlp_clip_encoder_forward(x, weights, biases, num_in_features,
                                   matmul_dtype=jnp.float32)
    y32 = jax.block_until_ready(y32)
    err32 = float(jnp.max(jnp.abs(y32 - y_ref)))
    assert err32 < 1e-4, err32

    # Also exercise the module's 2-D input path: (B, S*F) -> view as (B, S, F).
    y2 = mlp_clip_encoder_forward(x.reshape(batch, -1), weights, biases,
                                  num_in_features)
    y2 = jax.block_until_ready(y2)
    assert jnp.allclose(y2, y, atol=1e-6, rtol=0.0)

    print("KERNEL_OK")
</pallas_src>

<mosaic_0001>
module attributes {stable_mosaic.version = 11 : i64} {
  func.func @_mlp_kernel(%arg0: i32, %arg1: memref<128x32xf32, #tpu.memory_space<vmem>>, %arg2: memref<32x32xbf16, #tpu.memory_space<vmem>>, %arg3: memref<32x1xf32, #tpu.memory_space<vmem>>, %arg4: memref<32x32xbf16, #tpu.memory_space<vmem>>, %arg5: memref<32x1xf32, #tpu.memory_space<vmem>>, %arg6: memref<32x1xf32, #tpu.memory_space<vmem>>, %arg7: memref<1x1xf32, #tpu.memory_space<vmem>>, %arg8: memref<1x128xf32, #tpu.memory_space<vmem>>) attributes {dimension_semantics = [#tpu.dimension_semantics<parallel>], iteration_bounds = array<i64: 1>, scalar_prefetch = 0 : i64, scratch_operands = 0 : i64, tpu.core_type = #tpu.core_type<tc>, window_params = [{transform_indices = @transform_0, window_bounds = array<i64: 128, 32>}, {pipeline_mode = #tpu.pipeline_mode<synchronous>, transform_indices = @transform_1, window_bounds = array<i64: 32, 32>}, {pipeline_mode = #tpu.pipeline_mode<synchronous>, transform_indices = @transform_2, window_bounds = array<i64: 32, 1>}, {pipeline_mode = #tpu.pipeline_mode<synchronous>, transform_indices = @transform_3, window_bounds = array<i64: 32, 32>}, {pipeline_mode = #tpu.pipeline_mode<synchronous>, transform_indices = @transform_4, window_bounds = array<i64: 32, 1>}, {pipeline_mode = #tpu.pipeline_mode<synchronous>, transform_indices = @transform_5, window_bounds = array<i64: 32, 1>}, {pipeline_mode = #tpu.pipeline_mode<synchronous>, transform_indices = @transform_6, window_bounds = array<i64: 1, 1>}, {transform_indices = @transform_7, window_bounds = array<i64: 1, 128>}]} {
    %c0 = arith.constant 0 : index
    %c0_0 = arith.constant 0 : index
    %0 = vector.load %arg2[%c0, %c0_0] : memref<32x32xbf16, #tpu.memory_space<vmem>>, vector<32x32xbf16>
    %c0_1 = arith.constant 0 : index
    %c0_2 = arith.constant 0 : index
    %1 = vector.load %arg1[%c0_1, %c0_2] : memref<128x32xf32, #tpu.memory_space<vmem>>, vector<128x32xf32>
    %2 = arith.truncf %1 : vector<128x32xf32> to vector<128x32xbf16>
    %cst = arith.constant dense<0.000000e+00> : vector<32x128xf32>
    %3 = tpu.matmul %0, %2, %cst {dimension_numbers = #tpu.dot_dimension_numbers<[1], [1], [0], [0], [0, 0, 1, 0], [], []>} : vector<32x32xbf16>, vector<128x32xbf16>, vector<32x128xf32> -> vector<32x128xf32>
    %c0_3 = arith.constant 0 : index
    %c0_4 = arith.constant 0 : index
    %4 = vector.load %arg3[%c0_3, %c0_4] : memref<32x1xf32, #tpu.memory_space<vmem>>, vector<32x1xf32>
    %5 = vector.broadcast %4 : vector<32x1xf32> to vector<32x128xf32>
    %6 = arith.addf %3, %5 : vector<32x128xf32>
    %cst_5 = arith.constant 0.000000e+00 : f32
    %7 = vector.broadcast %cst_5 : f32 to vector<32x128xf32>
    %8 = arith.maximumf %6, %7 : vector<32x128xf32>
    %c0_6 = arith.constant 0 : index
    %c0_7 = arith.constant 0 : index
    %9 = vector.load %arg4[%c0_6, %c0_7] : memref<32x32xbf16, #tpu.memory_space<vmem>>, vector<32x32xbf16>
    %10 = arith.truncf %8 : vector<32x128xf32> to vector<32x128xbf16>
    %cst_8 = arith.constant dense<0.000000e+00> : vector<32x128xf32>
    %11 = tpu.matmul %9, %10, %cst_8 {dimension_numbers = #tpu.dot_dimension_numbers<[1], [0], [0], [1], [0, 0, 1, 1], [], []>} : vector<32x32xbf16>, vector<32x128xbf16>, vector<32x128xf32> -> vector<32x128xf32>
    %c0_9 = arith.constant 0 : index
    %c0_10 = arith.constant 0 : index
    %12 = vector.load %arg5[%c0_9, %c0_10] : memref<32x1xf32, #tpu.memory_space<vmem>>, vector<32x1xf32>
    %13 = vector.broadcast %12 : vector<32x1xf32> to vector<32x128xf32>
    %14 = arith.addf %11, %13 : vector<32x128xf32>
    %cst_11 = arith.constant 0.000000e+00 : f32
    %15 = vector.broadcast %cst_11 : f32 to vector<32x128xf32>
    %16 = arith.maximumf %14, %15 : vector<32x128xf32>
    %c0_12 = arith.constant 0 : index
    %c0_13 = arith.constant 0 : index
    %17 = vector.load %arg6[%c0_12, %c0_13] : memref<32x1xf32, #tpu.memory_space<vmem>>, vector<32x1xf32>
    %18 = vector.broadcast %17 : vector<32x1xf32> to vector<32x128xf32>
    %19 = arith.mulf %18, %16 : vector<32x128xf32>
    %cst_14 = arith.constant dense<0.000000e+00> : vector<128xf32>
    %20 = vector.multi_reduction <add>, %19, %cst_14 [0] : vector<32x128xf32> to vector<128xf32>
    %21 = vector.shape_cast %20 : vector<128xf32> to vector<1x128xf32>
    %c0_15 = arith.constant 0 : index
    %c0_16 = arith.constant 0 : index
    %22 = vector.load %arg7[%c0_15, %c0_16] : memref<1x1xf32, #tpu.memory_space<vmem>>, vector<1x1xf32>
    %23 = vector.broadcast %22 : vector<1x1xf32> to vector<1x128xf32>
    %24 = arith.addf %21, %23 : vector<1x128xf32>
    %cst_17 = arith.constant 0.000000e+00 : f32
    %25 = vector.broadcast %cst_17 : f32 to vector<1x128xf32>
    %26 = arith.subf %25, %24 : vector<1x128xf32>
    %27 = math.exp %26 : vector<1x128xf32>
    %cst_18 = arith.constant 1.000000e+00 : f32
    %28 = vector.broadcast %cst_18 : f32 to vector<1x128xf32>
    %29 = arith.addf %28, %27 : vector<1x128xf32>
    %30 = tpu.reciprocal %29 : vector<1x128xf32> -> vector<1x128xf32>
    %c0_19 = arith.constant 0 : index
    %c0_20 = arith.constant 0 : index
    %31 = vector.load %arg8[%c0_19, %c0_20] : memref<1x128xf32, #tpu.memory_space<vmem>>, vector<1x128xf32>
    tpu.vector_store %arg8[%c0_19, %c0_20], %30 {strides = array<i32>} : memref<1x128xf32, #tpu.memory_space<vmem>>, vector<1x128xf32>,
    return
  }
  func.func @transform_0(%arg0: i32) -> (i32, i32) {
    %c0_i32 = arith.constant 0 : i32
    %c0_i32_0 = arith.constant 0 : i32
    return %arg0, %c0_i32 : i32, i32
  }
  func.func @transform_1(%arg0: i32) -> (i32, i32) {
    %c0_i32 = arith.constant 0 : i32
    %c0_i32_0 = arith.constant 0 : i32
    %c0_i32_1 = arith.constant 0 : i32
    return %c0_i32, %c0_i32_0 : i32, i32
  }
  func.func @transform_2(%arg0: i32) -> (i32, i32) {
    %c0_i32 = arith.constant 0 : i32
    %c0_i32_0 = arith.constant 0 : i32
    %c0_i32_1 = arith.constant 0 : i32
    return %c0_i32, %c0_i32_0 : i32, i32
  }
  func.func @transform_3(%arg0: i32) -> (i32, i32) {
    %c0_i32 = arith.constant 0 : i32
    %c0_i32_0 = arith.constant 0 : i32
    %c0_i32_1 = arith.constant 0 : i32
    return %c0_i32, %c0_i32_0 : i32, i32
  }
  func.func @transform_4(%arg0: i32) -> (i32, i32) {
    %c0_i32 = arith.constant 0 : i32
    %c0_i32_0 = arith.constant 0 : i32
    %c0_i32_1 = arith.constant 0 : i32
    return %c0_i32, %c0_i32_0 : i32, i32
  }
  func.func @transform_5(%arg0: i32) -> (i32, i32) {
    %c0_i32 = arith.constant 0 : i32
    %c0_i32_0 = arith.constant 0 : i32
    %c0_i32_1 = arith.constant 0 : i32
    return %c0_i32, %c0_i32_0 : i32, i32
  }
  func.func @transform_6(%arg0: i32) -> (i32, i32) {
    %c0_i32 = arith.constant 0 : i32
    %c0_i32_0 = arith.constant 0 : i32
    %c0_i32_1 = arith.constant 0 : i32
    return %c0_i32, %c0_i32_0 : i32, i32
  }
  func.func @transform_7(%arg0: i32) -> (i32, i32) {
    %c0_i32 = arith.constant 0 : i32
    %c0_i32_0 = arith.constant 0 : i32
    return %c0_i32, %arg0 : i32, i32
  }
}

module attributes {stable_mosaic.version = 11 : i64} {
  func.func @_mlp_kernel(%arg0: i32, %arg1: memref<128x32xf32, #tpu.memory_space<vmem>>, %arg2: memref<32x32xbf16, #tpu.memory_space<vmem>>, %arg3: memref<32x1xf32, #tpu.memory_space<vmem>>, %arg4: memref<32x32xbf16, #tpu.memory_space<vmem>>, %arg5: memref<32x1xf32, #tpu.memory_space<vmem>>, %arg6: memref<32x1xf32, #tpu.memory_space<vmem>>, %arg7: memref<1x1xf32, #tpu.memory_space<vmem>>, %arg8: memref<1x128xf32, #tpu.memory_space<vmem>>) attributes {dimension_semantics = [#tpu.dimension_semantics<parallel>], iteration_bounds = array<i64: 1>, scalar_prefetch = 0 : i64, scratch_operands = 0 : i64, tpu.core_type = #tpu.core_type<tc>, window_params = [{transform_indices = @transform_0, window_bounds = array<i64: 128, 32>}, {pipeline_mode = #tpu.pipeline_mode<synchronous>, transform_indices = @transform_1, window_bounds = array<i64: 32, 32>}, {pipeline_mode = #tpu.pipeline_mode<synchronous>, transform_indices = @transform_2, window_bounds = array<i64: 32, 1>}, {pipeline_mode = #tpu.pipeline_mode<synchronous>, transform_indices = @transform_3, window_bounds = array<i64: 32, 32>}, {pipeline_mode = #tpu.pipeline_mode<synchronous>, transform_indices = @transform_4, window_bounds = array<i64: 32, 1>}, {pipeline_mode = #tpu.pipeline_mode<synchronous>, transform_indices = @transform_5, window_bounds = array<i64: 32, 1>}, {pipeline_mode = #tpu.pipeline_mode<synchronous>, transform_indices = @transform_6, window_bounds = array<i64: 1, 1>}, {transform_indices = @transform_7, window_bounds = array<i64: 1, 128>}]} {
    %c0 = arith.constant 0 : index
    %c0_0 = arith.constant 0 : index
    %0 = vector.load %arg2[%c0, %c0_0] : memref<32x32xbf16, #tpu.memory_space<vmem>>, vector<32x32xbf16>
    %c0_1 = arith.constant 0 : index
    %c0_2 = arith.constant 0 : index
    %1 = vector.load %arg1[%c0_1, %c0_2] : memref<128x32xf32, #tpu.memory_space<vmem>>, vector<128x32xf32>
    %2 = arith.truncf %1 : vector<128x32xf32> to vector<128x32xbf16>
    %cst = arith.constant dense<0.000000e+00> : vector<32x128xf32>
    %3 = tpu.matmul %0, %2, %cst {dimension_numbers = #tpu.dot_dimension_numbers<[1], [1], [0], [0], [0, 0, 1, 0], [], []>} : vector<32x32xbf16>, vector<128x32xbf16>, vector<32x128xf32> -> vector<32x128xf32>
    %c0_3 = arith.constant 0 : index
    %c0_4 = arith.constant 0 : index
    %4 = vector.load %arg3[%c0_3, %c0_4] : memref<32x1xf32, #tpu.memory_space<vmem>>, vector<32x1xf32>
    %5 = vector.broadcast %4 : vector<32x1xf32> to vector<32x128xf32>
    %6 = arith.addf %3, %5 : vector<32x128xf32>
    %cst_5 = arith.constant 0.000000e+00 : f32
    %7 = vector.broadcast %cst_5 : f32 to vector<32x128xf32>
    %8 = arith.maximumf %6, %7 : vector<32x128xf32>
    %c0_6 = arith.constant 0 : index
    %c0_7 = arith.constant 0 : index
    %9 = vector.load %arg4[%c0_6, %c0_7] : memref<32x32xbf16, #tpu.memory_space<vmem>>, vector<32x32xbf16>
    %10 = arith.truncf %8 : vector<32x128xf32> to vector<32x128xbf16>
    %cst_8 = arith.constant dense<0.000000e+00> : vector<32x128xf32>
    %11 = tpu.matmul %9, %10, %cst_8 {dimension_numbers = #tpu.dot_dimension_numbers<[1], [0], [0], [1], [0, 0, 1, 1], [], []>} : vector<32x32xbf16>, vector<32x128xbf16>, vector<32x128xf32> -> vector<32x128xf32>
    %c0_9 = arith.constant 0 : index
    %c0_10 = arith.constant 0 : index
    %12 = vector.load %arg5[%c0_9, %c0_10] : memref<32x1xf32, #tpu.memory_space<vmem>>, vector<32x1xf32>
    %13 = vector.broadcast %12 : vector<32x1xf32> to vector<32x128xf32>
    %14 = arith.addf %11, %13 : vector<32x128xf32>
    %cst_11 = arith.constant 0.000000e+00 : f32
    %15 = vector.broadcast %cst_11 : f32 to vector<32x128xf32>
    %16 = arith.maximumf %14, %15 : vector<32x128xf32>
    %c0_12 = arith.constant 0 : index
    %c0_13 = arith.constant 0 : index
    %17 = vector.load %arg6[%c0_12, %c0_13] : memref<32x1xf32, #tpu.memory_space<vmem>>, vector<32x1xf32>
    %18 = vector.broadcast %17 : vector<32x1xf32> to vector<32x128xf32>
    %19 = arith.mulf %18, %16 : vector<32x128xf32>
    %cst_14 = arith.constant dense<0.000000e+00> : vector<128xf32>
    %20 = vector.multi_reduction <add>, %19, %cst_14 [0] : vector<32x128xf32> to vector<128xf32>
    %21 = vector.shape_cast %20 : vector<128xf32> to vector<1x128xf32>
    %c0_15 = arith.constant 0 : index
    %c0_16 = arith.constant 0 : index
    %22 = vector.load %arg7[%c0_15, %c0_16] : memref<1x1xf32, #tpu.memory_space<vmem>>, vector<1x1xf32>
    %23 = vector.broadcast %22 : vector<1x1xf32> to vector<1x128xf32>
    %24 = arith.addf %21, %23 : vector<1x128xf32>
    %cst_17 = arith.constant 0.000000e+00 : f32
    %25 = vector.broadcast %cst_17 : f32 to vector<1x128xf32>
    %26 = arith.subf %25, %24 : vector<1x128xf32>
    %27 = math.exp %26 : vector<1x128xf32>
    %cst_18 = arith.constant 1.000000e+00 : f32
    %28 = vector.broadcast %cst_18 : f32 to vector<1x128xf32>
    %29 = arith.addf %28, %27 : vector<1x128xf32>
    %30 = tpu.reciprocal %29 : vector<1x128xf32> -> vector<1x128xf32>
    %c0_19 = arith.constant 0 : index
    %c0_20 = arith.constant 0 : index
    %31 = vector.load %arg8[%c0_19, %c0_20] : memref<1x128xf32, #tpu.memory_space<vmem>>, vector<1x128xf32>
    tpu.vector_store %arg8[%c0_19, %c0_20], %30 {strides = array<i32>} : memref<1x128xf32, #tpu.memory_space<vmem>>, vector<1x128xf32>,
    return
  }
  func.func @transform_0(%arg0: i32) -> (i32, i32) {
    %c0_i32 = arith.constant 0 : i32
    %c0_i32_0 = arith.constant 0 : i32
    return %arg0, %c0_i32 : i32, i32
  }
  func.func @transform_1(%arg0: i32) -> (i32, i32) {
    %c0_i32 = arith.constant 0 : i32
    %c0_i32_0 = arith.constant 0 : i32
    %c0_i32_1 = arith.constant 0 : i32
    return %c0_i32, %c0_i32_0 : i32, i32
  }
  func.func @transform_2(%arg0: i32) -> (i32, i32) {
    %c0_i32 = arith.constant 0 : i32
    %c0_i32_0 = arith.constant 0 : i32
    %c0_i32_1 = arith.constant 0 : i32
    return %c0_i32, %c0_i32_0 : i32, i32
  }
  func.func @transform_3(%arg0: i32) -> (i32, i32) {
    %c0_i32 = arith.constant 0 : i32
    %c0_i32_0 = arith.constant 0 : i32
    %c0_i32_1 = arith.constant 0 : i32
    return %c0_i32, %c0_i32_0 : i32, i32
  }
  func.func @transform_4(%arg0: i32) -> (i32, i32) {
    %c0_i32 = arith.constant 0 : i32
    %c0_i32_0 = arith.constant 0 : i32
    %c0_i32_1 = arith.constant 0 : i32
    return %c0_i32, %c0_i32_0 : i32, i32
  }
  func.func @transform_5(%arg0: i32) -> (i32, i32) {
    %c0_i32 = arith.constant 0 : i32
    %c0_i32_0 = arith.constant 0 : i32
    %c0_i32_1 = arith.constant 0 : i32
    return %c0_i32, %c0_i32_0 : i32, i32
  }
  func.func @transform_6(%arg0: i32) -> (i32, i32) {
    %c0_i32 = arith.constant 0 : i32
    %c0_i32_0 = arith.constant 0 : i32
    %c0_i32_1 = arith.constant 0 : i32
    return %c0_i32, %c0_i32_0 : i32, i32
  }
  func.func @transform_7(%arg0: i32) -> (i32, i32) {
    %c0_i32 = arith.constant 0 : i32
    %c0_i32_0 = arith.constant 0 : i32
    return %c0_i32, %arg0 : i32, i32
  }
}

</mosaic_0001>

<llo_original>
// kernel: tpu_custom_call.1
$region0: #{tpu_custom_call.1}
  #allocation0 [shape = 'u32[]', space=smem, size = 0x4, offset = 0x4, fixed_abs, tag = 'smem constant byte address 0x4 - core index']
  #allocation1 [shape = 'u32[144,128]{1,0:T(1,128)}', space=vmem, size = 0x12000, scoped, tag = 'internal scratch']
  #allocation2 [shape = 'f32[1,1]{1,0:T(1,128)S(1)}', space=vmem, size = 0x200, scoped, tag = 'scoped memory for tpu_custom_call.1']
  %s0 = inlined_call_operand.vmem [shape: f32[128,32], index: 0, kind: input, shape index: {}]
  %s1 = inlined_call_operand.vmem [shape: bf16[32,32], index: 1, kind: input, shape index: {}]
  %s2 = inlined_call_operand.vmem [shape: f32[32,1], index: 2, kind: input, shape index: {}]
  %s3 = inlined_call_operand.vmem [shape: bf16[32,32], index: 3, kind: input, shape index: {}]
  %s4 = inlined_call_operand.vmem [shape: f32[32,1], index: 4, kind: input, shape index: {}]
  %s5 = inlined_call_operand.vmem [shape: f32[32,1], index: 5, kind: input, shape index: {}]
  %s6 = inlined_call_operand.<no memory space> [shape: f32[1,1], index: 6, kind: input, shape index: {}]
  %s7 = inlined_call_operand.hbm [shape: f32[1,128], index: 7, kind: output, shape index: {}]
  %s8 = sld [smem:[#allocation0]]
  $region38: #{tpu_custom_call.1} parent=0
    _
  %s10 = ssub.s32 1, %s8
  %s11 = scalar_select 0, %s10, %s8
  %v12 = vstv %s6
  %13 = vst [vmem:[#allocation2] sm:$0x1] %v12
  $region1: #{tpu_custom_call.1} parent=0
    #allocation3 [shape = 'u8[512]{0}', space=vmem, size = 0x400, scoped, tag = 'output window, operand 0, single buffered']
    #allocation4 [shape = 's32[1]{0}', space=sflag, size = 0x4, scoped, tag = 'scoped memory for tpu_custom_call.1']
    %14 = vsyncpa [#allocation4], 0
    // Predicated region
    $region2: #{tpu_custom_call.1} parent=1 // pred_check
      _
    $region3: #{tpu_custom_call.1} parent=1 // pred_check_branch
      %16 = sbr.rel (0) target = $region5
    $region4: #{tpu_custom_call.1} parent=1 // pred_region
      _
    $region5: #{tpu_custom_call.1} parent=1 // pred_fallthru
      _
    // Predicated region
    $region6: #{tpu_custom_call.1} parent=1 // pred_check
      _
    $region7: #{tpu_custom_call.1} parent=1 // pred_check_branch
      %18 = sbr.rel (0) target = $region9
    $region8: #{tpu_custom_call.1} parent=1 // pred_region
      _
    $region9: #{tpu_custom_call.1} parent=1 // pred_fallthru
      _
    // Predicated region
    $region10: #{tpu_custom_call.1} parent=1 // pred_check
      _
    $region11: #{tpu_custom_call.1} parent=1 // pred_check_branch
      %20 = sbr.rel (0) target = $region13
    $region12: #{tpu_custom_call.1} parent=1 // pred_region
      _
    $region13: #{tpu_custom_call.1} parent=1 // pred_fallthru
      _
    // Predicated region
    $region14: #{tpu_custom_call.1} parent=1 // pred_check
      _
    $region15: #{tpu_custom_call.1} parent=1 // pred_check_branch
      %22 = sbr.rel (0) target = $region17
    $region16: #{tpu_custom_call.1} parent=1 // pred_region
      _
    $region17: #{tpu_custom_call.1} parent=1 // pred_fallthru
      _
    // Predicated region
    $region18: #{tpu_custom_call.1} parent=1 // pred_check
      _
    $region19: #{tpu_custom_call.1} parent=1 // pred_check_branch
      %24 = sbr.rel (0) target = $region21
    $region20: #{tpu_custom_call.1} parent=1 // pred_region
      _
    $region21: #{tpu_custom_call.1} parent=1 // pred_fallthru
      _
    // Predicated region
    $region22: #{tpu_custom_call.1} parent=1 // pred_check
      _
    $region23: #{tpu_custom_call.1} parent=1 // pred_check_branch
      %26 = sbr.rel (0) target = $region25
    $region24: #{tpu_custom_call.1} parent=1 // pred_region
      _
    $region25: #{tpu_custom_call.1} parent=1 // pred_fallthru
      _
    // Predicated region
    $region26: #{tpu_custom_call.1} parent=1 // pred_check
      _
    $region27: #{tpu_custom_call.1} parent=1 // pred_check_branch
      %28 = sbr.rel (0) target = $region29
    $region28: #{tpu_custom_call.1} parent=1 // pred_region
      _
    $region29: #{tpu_custom_call.1} parent=1 // pred_fallthru
      _
    %v30 = vld [vmem:[%s1] sm:$0xf]
    %v31 = vld [vmem:[%s1 + $0x4] sm:$0xf]
    %v32 = vld [vmem:[%s1 + $0x8] sm:$0xf]
    %v33 = vld [vmem:[%s1 + $0xc] sm:$0xf]
    %v34 = vld [vmem:[%s0] sm:$0xff]
    %v35 = vld [vmem:[%s0 + $0x8] sm:$0xff]
    %v36 = vld [vmem:[%s0 + $0x10] sm:$0xff]
    %v37 = vld [vmem:[%s0 + $0x18] sm:$0xff]
    %v38 = vld [vmem:[%s0 + $0x20] sm:$0xff]
    %v39 = vld [vmem:[%s0 + $0x28] sm:$0xff]
    %v40 = vld [vmem:[%s0 + $0x30] sm:$0xff]
    %v41 = vld [vmem:[%s0 + $0x38] sm:$0xff]
    %v42 = vld [vmem:[%s0 + $0x40] sm:$0xff]
    %v43 = vld [vmem:[%s0 + $0x48] sm:$0xff]
    %v44 = vld [vmem:[%s0 + $0x50] sm:$0xff]
    %v45 = vld [vmem:[%s0 + $0x58] sm:$0xff]
    %v46 = vld [vmem:[%s0 + $0x60] sm:$0xff]
    %v47 = vld [vmem:[%s0 + $0x68] sm:$0xff]
    %v48 = vld [vmem:[%s0 + $0x70] sm:$0xff]
    %v49 = vld [vmem:[%s0 + $0x78] sm:$0xff]
    %v50 = vpack.c.bf16 %v35, %v34
    %v51 = vpack.c.bf16 %v37, %v36
    %v52 = vpack.c.bf16 %v39, %v38
    %v53 = vpack.c.bf16 %v41, %v40
    %v54 = vpack.c.bf16 %v43, %v42
    %v55 = vpack.c.bf16 %v45, %v44
    %v56 = vpack.c.bf16 %v47, %v46
    %v57 = vpack.c.bf16 %v49, %v48
    %v58 = vld [vmem:[%s2] sm:$0xff]
    %v59 = vld [vmem:[%s2 + $0x8] sm:$0xff]
    %v60 = vld [vmem:[%s2 + $0x10] sm:$0xff]
    %v61 = vld [vmem:[%s2 + $0x18] sm:$0xff]
    %63 = vset.pattern.permute.xlu0 0
    %64 = vperm.xlu0 %63, %v58
    %v65 = vpop.permute.xlu0 %64
    %68 = vset.pattern.permute.xlu0 0
    %69 = vperm.xlu0 %68, %v59
    %v70 = vpop.permute.xlu0 %69
    %73 = vset.pattern.permute.xlu0 0
    %74 = vperm.xlu0 %73, %v60
    %v75 = vpop.permute.xlu0 %74
    %78 = vset.pattern.permute.xlu0 0
    %79 = vperm.xlu0 %78, %v61
    %v80 = vpop.permute.xlu0 %79
    %v86 = vunpack.c.l.b16 %v30
    %v87 = vunpack.c.l.b16 %v31
    %v88 = vunpack.c.l.b16 %v32
    %v89 = vunpack.c.l.b16 %v33
    %v90 = vpack.c.b16 %v87, %v86
    %v91 = vpack.c.b16 %v89, %v88
    %vm92 = vcmask 261120
    %v94 = vsel %vm92, %v90, 0
    %v97 = vsel %vm92, %v91, 0
    %v100 = vsel %vm92, %v50, 0
    %v103 = vsel %vm92, %v51, 0
    %v106 = vsel %vm92, %v52, 0
    %v109 = vsel %vm92, %v53, 0
    %v112 = vsel %vm92, %v54, 0
    %v115 = vsel %vm92, %v55, 0
    %v118 = vsel %vm92, %v56, 0
    %v121 = vsel %vm92, %v57, 0
    %123 = vmatprep.subr.bf16.mxu0 0
    %124 = vmatpush1.bf16.xpose.msra.mxu0 %v121
    %125 = vmatprep.subr.bf16.mxu0 0
    %126 = vmatpush1.bf16.xpose.msra.mxu0 %v118
    %127 = vmatprep.subr.bf16.mxu0 0
    %128 = vmatpush1.bf16.xpose.msra.mxu0 %v115
    %129 = vmatprep.subr.bf16.mxu0 0
    %130 = vmatpush1.bf16.xpose.msra.mxu0 %v112
    %131 = vmatprep.subr.bf16.mxu0 0
    %132 = vmatpush1.bf16.xpose.msra.mxu0 %v109
    %133 = vmatprep.subr.bf16.mxu0 0
    %134 = vmatpush1.bf16.xpose.msra.mxu0 %v106
    %135 = vmatprep.subr.bf16.mxu0 0
    %136 = vmatpush1.bf16.xpose.msra.mxu0 %v103
    %137 = vmatprep.subr.bf16.mxu0 0
    %138 = vmatpush1.bf16.xpose.msra.mxu0 %v100
    %139 = vmatprep.subr.bf16.mxu0 0
    %140 = vmatpush2.bf16.xpose.msra.mxu0 0
    %141 = vmatprep.subr.bf16.mxu0 0
    %142 = vmatpush2.bf16.xpose.msra.mxu0 0
    %143 = vmatprep.subr.bf16.mxu0 0
    %144 = vmatpush2.bf16.xpose.msra.mxu0 0
    %145 = vmatprep.subr.bf16.mxu0 0
    %146 = vmatpush2.bf16.xpose.msra.mxu0 0
    %147 = vmatprep.subr.bf16.mxu0 0
    %148 = vmatpush2.bf16.xpose.msra.mxu0 0
    %149 = vmatprep.subr.bf16.mxu0 0
    %150 = vmatpush2.bf16.xpose.msra.mxu0 0
    %151 = vmatprep.subr.bf16.mxu0 0
    %152 = vmatpush2.bf16.xpose.msra.mxu0 0
    %153 = vmatprep.subr.bf16.mxu0 0
    %154 = vmatpush2.bf16.xpose.msra.mxu0 0
    %155 = vmatprep.mubr.bf16.mxu0 0
    %156 = vmatmul.mubr.bf16.gmra.mxu0 %v94
    %v157 = vpop.f32.mrf.mxu0
    %v158 = vadd.f32 %v65, %v157
    %v159 = vpop.f32.mrf.mxu0
    %v160 = vpop.f32.mrf.mxu0
    %v161 = vadd.f32 %v70, %v160
    %v162 = vpop.f32.mrf.mxu0
    %163 = vmatprep.mubr.bf16.mxu0 0
    %164 = vmatmul.mubr.bf16.gmra.mxu0 %v97
    %v165 = vpop.f32.mrf.mxu0
    %v166 = vadd.f32 %v75, %v165
    %v167 = vpop.f32.mrf.mxu0
    %v168 = vpop.f32.mrf.mxu0
    %v169 = vadd.f32 %v80, %v168
    %v170 = vpop.f32.mrf.mxu0
    %171 = vdwg.mxu0
    %v172 = vmax.f32 %v158, 0.0
    %v173 = vmax.f32 %v161, 0.0
    %v174 = vmax.f32 %v166, 0.0
    %v175 = vmax.f32 %v169, 0.0
    %v176 = vld [vmem:[%s3] sm:$0xf]
    %v177 = vld [vmem:[%s3 + $0x4] sm:$0xf]
    %v178 = vld [vmem:[%s3 + $0x8] sm:$0xf]
    %v179 = vld [vmem:[%s3 + $0xc] sm:$0xf]
    %v180 = vpack.c.bf16 %v173, %v172
    %v181 = vpack.c.bf16 %v175, %v174
    %v182 = vld [vmem:[%s4] sm:$0xff]
    %v183 = vld [vmem:[%s4 + $0x8] sm:$0xff]
    %v184 = vld [vmem:[%s4 + $0x10] sm:$0xff]
    %v185 = vld [vmem:[%s4 + $0x18] sm:$0xff]
    %187 = vset.pattern.permute.xlu0 0
    %188 = vperm.xlu0 %187, %v182
    %v189 = vpop.permute.xlu0 %188
    %192 = vset.pattern.permute.xlu0 0
    %193 = vperm.xlu0 %192, %v183
    %v194 = vpop.permute.xlu0 %193
    %197 = vset.pattern.permute.xlu0 0
    %198 = vperm.xlu0 %197, %v184
    %v199 = vpop.permute.xlu0 %198
    %202 = vset.pattern.permute.xlu0 0
    %203 = vperm.xlu0 %202, %v185
    %v204 = vpop.permute.xlu0 %203
    %v210 = vunpack.c.l.b16 %v176
    %v211 = vunpack.c.l.b16 %v177
    %v212 = vunpack.c.l.b16 %v178
    %v213 = vunpack.c.l.b16 %v179
    %v214 = vpack.c.b16 %v211, %v210
    %v215 = vpack.c.b16 %v213, %v212
    %v217 = vsel %vm92, %v214, 0
    %v220 = vsel %vm92, %v215, 0
    %222 = vmatprep.subr.bf16.mxu0 0
    %223 = vmatpush1.bf16.msra.mxu0 0
    %224 = vmatprep.subr.bf16.mxu0 0
    %225 = vmatpush1.bf16.msra.mxu0 0
    %226 = vmatprep.subr.bf16.mxu0 0
    %227 = vmatpush1.bf16.msra.mxu0 0
    %228 = vmatprep.subr.bf16.mxu0 0
    %229 = vmatpush1.bf16.msra.mxu0 0
    %230 = vmatprep.subr.bf16.mxu0 0
    %231 = vmatpush1.bf16.msra.mxu0 0
    %232 = vmatprep.subr.bf16.mxu0 0
    %233 = vmatpush1.bf16.msra.mxu0 0
    %234 = vmatprep.subr.bf16.mxu0 0
    %235 = vmatpush1.bf16.msra.mxu0 %v181
    %236 = vmatprep.subr.bf16.mxu0 0
    %237 = vmatpush1.bf16.msra.mxu0 %v180
    %238 = vmatprep.subr.bf16.mxu0 0
    %239 = vmatpush2.bf16.msra.mxu0 0
    %240 = vmatprep.subr.bf16.mxu0 0
    %241 = vmatpush2.bf16.msra.mxu0 0
    %242 = vmatprep.subr.bf16.mxu0 0
    %243 = vmatpush2.bf16.msra.mxu0 0
    %244 = vmatprep.subr.bf16.mxu0 0
    %245 = vmatpush2.bf16.msra.mxu0 0
    %246 = vmatprep.subr.bf16.mxu0 0
    %247 = vmatpush2.bf16.msra.mxu0 0
    %248 = vmatprep.subr.bf16.mxu0 0
    %249 = vmatpush2.bf16.msra.mxu0 0
    %250 = vmatprep.subr.bf16.mxu0 0
    %251 = vmatpush2.bf16.msra.mxu0 0
    %252 = vmatprep.subr.bf16.mxu0 0
    %253 = vmatpush2.bf16.msra.mxu0 0
    %254 = vmatprep.mubr.bf16.mxu0 0
    %255 = vmatmul.mubr.bf16.gmra.mxu0 %v217
    %v256 = vpop.f32.mrf.mxu0
    %v257 = vadd.f32 %v189, %v256
    %v258 = vpop.f32.mrf.mxu0
    %v259 = vpop.f32.mrf.mxu0
    %v260 = vadd.f32 %v194, %v259
    %v261 = vpop.f32.mrf.mxu0
    %262 = vmatprep.mubr.bf16.mxu0 0
    %263 = vmatmul.mubr.bf16.gmra.mxu0 %v220
    %v264 = vpop.f32.mrf.mxu0
    %v265 = vadd.f32 %v199, %v264
    %v266 = vpop.f32.mrf.mxu0
    %v267 = vpop.f32.mrf.mxu0
    %v268 = vadd.f32 %v204, %v267
    %v269 = vpop.f32.mrf.mxu0
    %270 = vdwg.mxu0
    %v271 = vmax.f32 %v257, 0.0
    %v272 = vmax.f32 %v260, 0.0
    %v273 = vmax.f32 %v265, 0.0
    %v274 = vmax.f32 %v268, 0.0
    %v275 = vld [vmem:[%s5] sm:$0xff]
    %v276 = vld [vmem:[%s5 + $0x8] sm:$0xff]
    %v277 = vld [vmem:[%s5 + $0x10] sm:$0xff]
    %v278 = vld [vmem:[%s5 + $0x18] sm:$0xff]
    %280 = vset.pattern.permute.xlu0 0
    %281 = vperm.xlu0 %280, %v275
    %v282 = vpop.permute.xlu0 %281
    %285 = vset.pattern.permute.xlu0 0
    %286 = vperm.xlu0 %285, %v276
    %v287 = vpop.permute.xlu0 %286
    %290 = vset.pattern.permute.xlu0 0
    %291 = vperm.xlu0 %290, %v277
    %v292 = vpop.permute.xlu0 %291
    %295 = vset.pattern.permute.xlu0 0
    %296 = vperm.xlu0 %295, %v278
    %v297 = vpop.permute.xlu0 %296
    %v299 = vmul.f32 %v282, %v271
    %v300 = vmul.f32 %v287, %v272
    %v301 = vmul.f32 %v292, %v273
    %v302 = vmul.f32 %v297, %v274
    %v303 = vadd.f32 %v299, %v300
    %v304 = vadd.f32 %v303, %v301
    %v305 = vadd.f32 %v304, %v302
    %v306 = vrot.slane %v305, 4
    %v307 = vadd.f32 %v305, %v306
    %v308 = vrot.slane %v307, 2
    %v309 = vadd.f32 %v307, %v308
    %v310 = vrot.slane %v309, 1
    %v311 = vadd.f32 %v309, %v310
    %v312 = vld [vmem:[#allocation2] sm:$0x1]
    %314 = vset.pattern.permute.xlu0 0
    %315 = vperm.xlu0 %314, %v312
    %v316 = vpop.permute.xlu0 %315
    %v318 = vlaneseq
    %v319 = vshrl.u32 %v318, 7
    %v320 = vsub.s32 0, %v319
    %v321 = vrot.slane %v316, %v320
    %v322 = vadd.f32 %v311, %v321
    %v323 = vsub.f32 0.0, %v322
    %v324 = vmul.f32 %v323, 1.442695
    %v325 = vpow.pop %v324
    %v326 = vadd.f32 %v325, 1.0
    %v327 = vrcp.pop %v326
    %328 = vst [vmem:[#allocation3] sm:$0x1] %v327
    // Predicated region
    $region30: #{tpu_custom_call.1} parent=1 // pred_check
      _
    $region31: #{tpu_custom_call.1} parent=1 // pred_check_branch
      %330 = sbr.rel (0) target = $region33
    $region32: #{tpu_custom_call.1} parent=1 // pred_region
      %s332 = ssub.s32 16, 16
      %333 = vsyncadd [#allocation4], %s332
      %s335 = sshll.u32 [#allocation3], 4
      %s336 = int_to_ptr.vmem [resolvable:$true] %s335
      %338 = dma.vmem_to_hbm [thread:$0]  %s336, 16, %s7, [#allocation4]
    $region33: #{tpu_custom_call.1} parent=1 // pred_fallthru
      _
    // Predicated region
    $region34: #{tpu_custom_call.1} parent=1 // pred_check
      _
    $region35: #{tpu_custom_call.1} parent=1 // pred_check_branch
      %340 = sbr.rel (0) target = $region37
    $region36: #{tpu_custom_call.1} parent=1 // pred_region
      %341 = dma.done [#allocation4], 16
    $region37: #{tpu_custom_call.1} parent=1 // pred_fallthru
      _
    %342 = vsyncpa [#allocation4], 1

// kernel: tpu_custom_call.1
$region0: #{tpu_custom_call.1}
  #allocation0 [shape = 'u32[]', space=smem, size = 0x4, offset = 0x4, fixed_abs, tag = 'smem constant byte address 0x4 - core index']
  #allocation1 [shape = 'u32[144,128]{1,0:T(1,128)}', space=vmem, size = 0x12000, scoped, tag = 'internal scratch']
  #allocation2 [shape = 'f32[1,1]{1,0:T(1,128)S(1)}', space=vmem, size = 0x200, scoped, tag = 'scoped memory for tpu_custom_call.1']
  %s0 = inlined_call_operand.vmem [shape: f32[128,32], index: 0, kind: input, shape index: {}]
  %s1 = inlined_call_operand.vmem [shape: bf16[32,32], index: 1, kind: input, shape index: {}]
  %s2 = inlined_call_operand.vmem [shape: f32[32,1], index: 2, kind: input, shape index: {}]
  %s3 = inlined_call_operand.vmem [shape: bf16[32,32], index: 3, kind: input, shape index: {}]
  %s4 = inlined_call_operand.vmem [shape: f32[32,1], index: 4, kind: input, shape index: {}]
  %s5 = inlined_call_operand.vmem [shape: f32[32,1], index: 5, kind: input, shape index: {}]
  %s6 = inlined_call_operand.<no memory space> [shape: f32[1,1], index: 6, kind: input, shape index: {}]
  %s7 = inlined_call_operand.hbm [shape: f32[1,128], index: 7, kind: output, shape index: {}]
  %s8 = sld [smem:[#allocation0]]
  $region38: #{tpu_custom_call.1} parent=0
    _
  %s10 = ssub.s32 1, %s8
  %s11 = scalar_select 0, %s10, %s8
  %v12 = vstv %s6
  %13 = vst [vmem:[#allocation2] sm:$0x1] %v12
  $region1: #{tpu_custom_call.1} parent=0
    #allocation3 [shape = 'u8[512]{0}', space=vmem, size = 0x400, scoped, tag = 'output window, operand 0, single buffered']
    #allocation4 [shape = 's32[1]{0}', space=sflag, size = 0x4, scoped, tag = 'scoped memory for tpu_custom_call.1']
    %14 = vsyncpa [#allocation4], 0
    // Predicated region
    $region2: #{tpu_custom_call.1} parent=1 // pred_check
      _
    $region3: #{tpu_custom_call.1} parent=1 // pred_check_branch
      %16 = sbr.rel (0) target = $region5
    $region4: #{tpu_custom_call.1} parent=1 // pred_region
      _
    $region5: #{tpu_custom_call.1} parent=1 // pred_fallthru
      _
    // Predicated region
    $region6: #{tpu_custom_call.1} parent=1 // pred_check
      _
    $region7: #{tpu_custom_call.1} parent=1 // pred_check_branch
      %18 = sbr.rel (0) target = $region9
    $region8: #{tpu_custom_call.1} parent=1 // pred_region
      _
    $region9: #{tpu_custom_call.1} parent=1 // pred_fallthru
      _
    // Predicated region
    $region10: #{tpu_custom_call.1} parent=1 // pred_check
      _
    $region11: #{tpu_custom_call.1} parent=1 // pred_check_branch
      %20 = sbr.rel (0) target = $region13
    $region12: #{tpu_custom_call.1} parent=1 // pred_region
      _
    $region13: #{tpu_custom_call.1} parent=1 // pred_fallthru
      _
    // Predicated region
    $region14: #{tpu_custom_call.1} parent=1 // pred_check
      _
    $region15: #{tpu_custom_call.1} parent=1 // pred_check_branch
      %22 = sbr.rel (0) target = $region17
    $region16: #{tpu_custom_call.1} parent=1 // pred_region
      _
    $region17: #{tpu_custom_call.1} parent=1 // pred_fallthru
      _
    // Predicated region
    $region18: #{tpu_custom_call.1} parent=1 // pred_check
      _
    $region19: #{tpu_custom_call.1} parent=1 // pred_check_branch
      %24 = sbr.rel (0) target = $region21
    $region20: #{tpu_custom_call.1} parent=1 // pred_region
      _
    $region21: #{tpu_custom_call.1} parent=1 // pred_fallthru
      _
    // Predicated region
    $region22: #{tpu_custom_call.1} parent=1 // pred_check
      _
    $region23: #{tpu_custom_call.1} parent=1 // pred_check_branch
      %26 = sbr.rel (0) target = $region25
    $region24: #{tpu_custom_call.1} parent=1 // pred_region
      _
    $region25: #{tpu_custom_call.1} parent=1 // pred_fallthru
      _
    // Predicated region
    $region26: #{tpu_custom_call.1} parent=1 // pred_check
      _
    $region27: #{tpu_custom_call.1} parent=1 // pred_check_branch
      %28 = sbr.rel (0) target = $region29
    $region28: #{tpu_custom_call.1} parent=1 // pred_region
      _
    $region29: #{tpu_custom_call.1} parent=1 // pred_fallthru
      _
    %v30 = vld [vmem:[%s1] sm:$0xf]
    %v31 = vld [vmem:[%s1 + $0x4] sm:$0xf]
    %v32 = vld [vmem:[%s1 + $0x8] sm:$0xf]
    %v33 = vld [vmem:[%s1 + $0xc] sm:$0xf]
    %v34 = vld [vmem:[%s0] sm:$0xff]
    %v35 = vld [vmem:[%s0 + $0x8] sm:$0xff]
    %v36 = vld [vmem:[%s0 + $0x10] sm:$0xff]
    %v37 = vld [vmem:[%s0 + $0x18] sm:$0xff]
    %v38 = vld [vmem:[%s0 + $0x20] sm:$0xff]
    %v39 = vld [vmem:[%s0 + $0x28] sm:$0xff]
    %v40 = vld [vmem:[%s0 + $0x30] sm:$0xff]
    %v41 = vld [vmem:[%s0 + $0x38] sm:$0xff]
    %v42 = vld [vmem:[%s0 + $0x40] sm:$0xff]
    %v43 = vld [vmem:[%s0 + $0x48] sm:$0xff]
    %v44 = vld [vmem:[%s0 + $0x50] sm:$0xff]
    %v45 = vld [vmem:[%s0 + $0x58] sm:$0xff]
    %v46 = vld [vmem:[%s0 + $0x60] sm:$0xff]
    %v47 = vld [vmem:[%s0 + $0x68] sm:$0xff]
    %v48 = vld [vmem:[%s0 + $0x70] sm:$0xff]
    %v49 = vld [vmem:[%s0 + $0x78] sm:$0xff]
    %v50 = vpack.c.bf16 %v35, %v34
    %v51 = vpack.c.bf16 %v37, %v36
    %v52 = vpack.c.bf16 %v39, %v38
    %v53 = vpack.c.bf16 %v41, %v40
    %v54 = vpack.c.bf16 %v43, %v42
    %v55 = vpack.c.bf16 %v45, %v44
    %v56 = vpack.c.bf16 %v47, %v46
    %v57 = vpack.c.bf16 %v49, %v48
    %v58 = vld [vmem:[%s2] sm:$0xff]
    %v59 = vld [vmem:[%s2 + $0x8] sm:$0xff]
    %v60 = vld [vmem:[%s2 + $0x10] sm:$0xff]
    %v61 = vld [vmem:[%s2 + $0x18] sm:$0xff]
    %63 = vset.pattern.permute.xlu0 0
    %64 = vperm.xlu0 %63, %v58
    %v65 = vpop.permute.xlu0 %64
    %68 = vset.pattern.permute.xlu0 0
    %69 = vperm.xlu0 %68, %v59
    %v70 = vpop.permute.xlu0 %69
    %73 = vset.pattern.permute.xlu0 0
    %74 = vperm.xlu0 %73, %v60
    %v75 = vpop.permute.xlu0 %74
    %78 = vset.pattern.permute.xlu0 0
    %79 = vperm.xlu0 %78, %v61
    %v80 = vpop.permute.xlu0 %79
    %v86 = vunpack.c.l.b16 %v30
    %v87 = vunpack.c.l.b16 %v31
    %v88 = vunpack.c.l.b16 %v32
    %v89 = vunpack.c.l.b16 %v33
    %v90 = vpack.c.b16 %v87, %v86
    %v91 = vpack.c.b16 %v89, %v88
    %vm92 = vcmask 261120
    %v94 = vsel %vm92, %v90, 0
    %v97 = vsel %vm92, %v91, 0
    %v100 = vsel %vm92, %v50, 0
    %v103 = vsel %vm92, %v51, 0
    %v106 = vsel %vm92, %v52, 0
    %v109 = vsel %vm92, %v53, 0
    %v112 = vsel %vm92, %v54, 0
    %v115 = vsel %vm92, %v55, 0
    %v118 = vsel %vm92, %v56, 0
    %v121 = vsel %vm92, %v57, 0
    %123 = vmatprep.subr.bf16.mxu0 0
    %124 = vmatpush1.bf16.xpose.msra.mxu0 %v121
    %125 = vmatprep.subr.bf16.mxu0 0
    %126 = vmatpush1.bf16.xpose.msra.mxu0 %v118
    %127 = vmatprep.subr.bf16.mxu0 0
    %128 = vmatpush1.bf16.xpose.msra.mxu0 %v115
    %129 = vmatprep.subr.bf16.mxu0 0
    %130 = vmatpush1.bf16.xpose.msra.mxu0 %v112
    %131 = vmatprep.subr.bf16.mxu0 0
    %132 = vmatpush1.bf16.xpose.msra.mxu0 %v109
    %133 = vmatprep.subr.bf16.mxu0 0
    %134 = vmatpush1.bf16.xpose.msra.mxu0 %v106
    %135 = vmatprep.subr.bf16.mxu0 0
    %136 = vmatpush1.bf16.xpose.msra.mxu0 %v103
    %137 = vmatprep.subr.bf16.mxu0 0
    %138 = vmatpush1.bf16.xpose.msra.mxu0 %v100
    %139 = vmatprep.subr.bf16.mxu0 0
    %140 = vmatpush2.bf16.xpose.msra.mxu0 0
    %141 = vmatprep.subr.bf16.mxu0 0
    %142 = vmatpush2.bf16.xpose.msra.mxu0 0
    %143 = vmatprep.subr.bf16.mxu0 0
    %144 = vmatpush2.bf16.xpose.msra.mxu0 0
    %145 = vmatprep.subr.bf16.mxu0 0
    %146 = vmatpush2.bf16.xpose.msra.mxu0 0
    %147 = vmatprep.subr.bf16.mxu0 0
    %148 = vmatpush2.bf16.xpose.msra.mxu0 0
    %149 = vmatprep.subr.bf16.mxu0 0
    %150 = vmatpush2.bf16.xpose.msra.mxu0 0
    %151 = vmatprep.subr.bf16.mxu0 0
    %152 = vmatpush2.bf16.xpose.msra.mxu0 0
    %153 = vmatprep.subr.bf16.mxu0 0
    %154 = vmatpush2.bf16.xpose.msra.mxu0 0
    %155 = vmatprep.mubr.bf16.mxu0 0
    %156 = vmatmul.mubr.bf16.gmra.mxu0 %v94
    %v157 = vpop.f32.mrf.mxu0
    %v158 = vadd.f32 %v65, %v157
    %v159 = vpop.f32.mrf.mxu0
    %v160 = vpop.f32.mrf.mxu0
    %v161 = vadd.f32 %v70, %v160
    %v162 = vpop.f32.mrf.mxu0
    %163 = vmatprep.mubr.bf16.mxu0 0
    %164 = vmatmul.mubr.bf16.gmra.mxu0 %v97
    %v165 = vpop.f32.mrf.mxu0
    %v166 = vadd.f32 %v75, %v165
    %v167 = vpop.f32.mrf.mxu0
    %v168 = vpop.f32.mrf.mxu0
    %v169 = vadd.f32 %v80, %v168
    %v170 = vpop.f32.mrf.mxu0
    %171 = vdwg.mxu0
    %v172 = vmax.f32 %v158, 0.0
    %v173 = vmax.f32 %v161, 0.0
    %v174 = vmax.f32 %v166, 0.0
    %v175 = vmax.f32 %v169, 0.0
    %v176 = vld [vmem:[%s3] sm:$0xf]
    %v177 = vld [vmem:[%s3 + $0x4] sm:$0xf]
    %v178 = vld [vmem:[%s3 + $0x8] sm:$0xf]
    %v179 = vld [vmem:[%s3 + $0xc] sm:$0xf]
    %v180 = vpack.c.bf16 %v173, %v172
    %v181 = vpack.c.bf16 %v175, %v174
    %v182 = vld [vmem:[%s4] sm:$0xff]
    %v183 = vld [vmem:[%s4 + $0x8] sm:$0xff]
    %v184 = vld [vmem:[%s4 + $0x10] sm:$0xff]
    %v185 = vld [vmem:[%s4 + $0x18] sm:$0xff]
    %187 = vset.pattern.permute.xlu0 0
    %188 = vperm.xlu0 %187, %v182
    %v189 = vpop.permute.xlu0 %188
    %192 = vset.pattern.permute.xlu0 0
    %193 = vperm.xlu0 %192, %v183
    %v194 = vpop.permute.xlu0 %193
    %197 = vset.pattern.permute.xlu0 0
    %198 = vperm.xlu0 %197, %v184
    %v199 = vpop.permute.xlu0 %198
    %202 = vset.pattern.permute.xlu0 0
    %203 = vperm.xlu0 %202, %v185
    %v204 = vpop.permute.xlu0 %203
    %v210 = vunpack.c.l.b16 %v176
    %v211 = vunpack.c.l.b16 %v177
    %v212 = vunpack.c.l.b16 %v178
    %v213 = vunpack.c.l.b16 %v179
    %v214 = vpack.c.b16 %v211, %v210
    %v215 = vpack.c.b16 %v213, %v212
    %v217 = vsel %vm92, %v214, 0
    %v220 = vsel %vm92, %v215, 0
    %222 = vmatprep.subr.bf16.mxu0 0
    %223 = vmatpush1.bf16.msra.mxu0 0
    %224 = vmatprep.subr.bf16.mxu0 0
    %225 = vmatpush1.bf16.msra.mxu0 0
    %226 = vmatprep.subr.bf16.mxu0 0
    %227 = vmatpush1.bf16.msra.mxu0 0
    %228 = vmatprep.subr.bf16.mxu0 0
    %229 = vmatpush1.bf16.msra.mxu0 0
    %230 = vmatprep.subr.bf16.mxu0 0
    %231 = vmatpush1.bf16.msra.mxu0 0
    %232 = vmatprep.subr.bf16.mxu0 0
    %233 = vmatpush1.bf16.msra.mxu0 0
    %234 = vmatprep.subr.bf16.mxu0 0
    %235 = vmatpush1.bf16.msra.mxu0 %v181
    %236 = vmatprep.subr.bf16.mxu0 0
    %237 = vmatpush1.bf16.msra.mxu0 %v180
    %238 = vmatprep.subr.bf16.mxu0 0
    %239 = vmatpush2.bf16.msra.mxu0 0
    %240 = vmatprep.subr.bf16.mxu0 0
    %241 = vmatpush2.bf16.msra.mxu0 0
    %242 = vmatprep.subr.bf16.mxu0 0
    %243 = vmatpush2.bf16.msra.mxu0 0
    %244 = vmatprep.subr.bf16.mxu0 0
    %245 = vmatpush2.bf16.msra.mxu0 0
    %246 = vmatprep.subr.bf16.mxu0 0
    %247 = vmatpush2.bf16.msra.mxu0 0
    %248 = vmatprep.subr.bf16.mxu0 0
    %249 = vmatpush2.bf16.msra.mxu0 0
    %250 = vmatprep.subr.bf16.mxu0 0
    %251 = vmatpush2.bf16.msra.mxu0 0
    %252 = vmatprep.subr.bf16.mxu0 0
    %253 = vmatpush2.bf16.msra.mxu0 0
    %254 = vmatprep.mubr.bf16.mxu0 0
    %255 = vmatmul.mubr.bf16.gmra.mxu0 %v217
    %v256 = vpop.f32.mrf.mxu0
    %v257 = vadd.f32 %v189, %v256
    %v258 = vpop.f32.mrf.mxu0
    %v259 = vpop.f32.mrf.mxu0
    %v260 = vadd.f32 %v194, %v259
    %v261 = vpop.f32.mrf.mxu0
    %262 = vmatprep.mubr.bf16.mxu0 0
    %263 = vmatmul.mubr.bf16.gmra.mxu0 %v220
    %v264 = vpop.f32.mrf.mxu0
    %v265 = vadd.f32 %v199, %v264
    %v266 = vpop.f32.mrf.mxu0
    %v267 = vpop.f32.mrf.mxu0
    %v268 = vadd.f32 %v204, %v267
    %v269 = vpop.f32.mrf.mxu0
    %270 = vdwg.mxu0
    %v271 = vmax.f32 %v257, 0.0
    %v272 = vmax.f32 %v260, 0.0
    %v273 = vmax.f32 %v265, 0.0
    %v274 = vmax.f32 %v268, 0.0
    %v275 = vld [vmem:[%s5] sm:$0xff]
    %v276 = vld [vmem:[%s5 + $0x8] sm:$0xff]
    %v277 = vld [vmem:[%s5 + $0x10] sm:$0xff]
    %v278 = vld [vmem:[%s5 + $0x18] sm:$0xff]
    %280 = vset.pattern.permute.xlu0 0
    %281 = vperm.xlu0 %280, %v275
    %v282 = vpop.permute.xlu0 %281
    %285 = vset.pattern.permute.xlu0 0
    %286 = vperm.xlu0 %285, %v276
    %v287 = vpop.permute.xlu0 %286
    %290 = vset.pattern.permute.xlu0 0
    %291 = vperm.xlu0 %290, %v277
    %v292 = vpop.permute.xlu0 %291
    %295 = vset.pattern.permute.xlu0 0
    %296 = vperm.xlu0 %295, %v278
    %v297 = vpop.permute.xlu0 %296
    %v299 = vmul.f32 %v282, %v271
    %v300 = vmul.f32 %v287, %v272
    %v301 = vmul.f32 %v292, %v273
    %v302 = vmul.f32 %v297, %v274
    %v303 = vadd.f32 %v299, %v300
    %v304 = vadd.f32 %v303, %v301
    %v305 = vadd.f32 %v304, %v302
    %v306 = vrot.slane %v305, 4
    %v307 = vadd.f32 %v305, %v306
    %v308 = vrot.slane %v307, 2
    %v309 = vadd.f32 %v307, %v308
    %v310 = vrot.slane %v309, 1
    %v311 = vadd.f32 %v309, %v310
    %v312 = vld [vmem:[#allocation2] sm:$0x1]
    %314 = vset.pattern.permute.xlu0 0
    %315 = vperm.xlu0 %314, %v312
    %v316 = vpop.permute.xlu0 %315
    %v318 = vlaneseq
    %v319 = vshrl.u32 %v318, 7
    %v320 = vsub.s32 0, %v319
    %v321 = vrot.slane %v316, %v320
    %v322 = vadd.f32 %v311, %v321
    %v323 = vsub.f32 0.0, %v322
    %v324 = vmul.f32 %v323, 1.442695
    %v325 = vpow.pop %v324
    %v326 = vadd.f32 %v325, 1.0
    %v327 = vrcp.pop %v326
    %328 = vst [vmem:[#allocation3] sm:$0x1] %v327
    // Predicated region
    $region30: #{tpu_custom_call.1} parent=1 // pred_check
      _
    $region31: #{tpu_custom_call.1} parent=1 // pred_check_branch
      %330 = sbr.rel (0) target = $region33
    $region32: #{tpu_custom_call.1} parent=1 // pred_region
      %s332 = ssub.s32 16, 16
      %333 = vsyncadd [#allocation4], %s332
      %s335 = sshll.u32 [#allocation3], 4
      %s336 = int_to_ptr.vmem [resolvable:$true] %s335
      %338 = dma.vmem_to_hbm [thread:$0]  %s336, 16, %s7, [#allocation4]
    $region33: #{tpu_custom_call.1} parent=1 // pred_fallthru
      _
    // Predicated region
    $region34: #{tpu_custom_call.1} parent=1 // pred_check
      _
    $region35: #{tpu_custom_call.1} parent=1 // pred_check_branch
      %340 = sbr.rel (0) target = $region37
    $region36: #{tpu_custom_call.1} parent=1 // pred_region
      %341 = dma.done [#allocation4], 16
    $region37: #{tpu_custom_call.1} parent=1 // pred_fallthru
      _
    %342 = vsyncpa [#allocation4], 1

</llo_original>
